<compile_context>
chip_gen: v7x
topology: tpu7x:2x2x1
jax: 0.10.0
libtpu: 0.0.40
codegen_flags: <defaults>
</compile_context>

<pallas_src>
import functools

import jax
import jax.numpy as jnp
from jax.experimental import pallas as pl
from jax.experimental.pallas import tpu as pltpu


def _round_up(x, m):
    return ((x + m - 1) // m) * m


def _divisor_tile(npad, target):
    """Largest multiple of 128 that divides npad and is <= max(target, 128)."""
    nblk = npad // 128
    t = max(1, min(max(target, 128) // 128, nblk))
    while nblk % t:
        t -= 1
    return t * 128


def _plan_tiles(n, tm_target, tk_target):
    """Pick (Npad, tm, tk).

    N is padded to a multiple of 128; a few extra 128-steps are considered so
    that good tile divisors exist (e.g. a prime number of 128-blocks would
    otherwise force 128x128 tiles).  Scoring is a rough HBM model:
    A-stream bytes / BW + fixed ~0.35us per-grid-step pipeline overhead.
    """
    base = _round_up(max(n, 128), 128)
    best = None
    for extra in range(4):
        npad = base + extra * 128
        tm = _divisor_tile(npad, tm_target)
        tk = _divisor_tile(npad, tk_target)
        # v7x megacore: keep at least 2 row tiles so both TCs get work.
        if npad // tm < 2 and npad >= 256:
            tm = _divisor_tile(npad, npad // 2)
        steps = (npad // tm) * (npad // tk)
        cost = (npad * npad * 2) / 1.3e12 + steps * 0.35e-6
        if best is None or cost < best[0]:
            best = (cost, npad, tm, tk)
    return best[1], best[2], best[3]


def drcgc_kernel(scal_ref, a_ref, x_ref, xrow_ref, m_ref,
                 out_ref, next_ref, acc_ref, *, tk, x_resident):
    """Grid = (row tiles i, K tiles k). acc_ref accumulates AX for row tile i."""
    k = pl.program_id(1)

    @pl.when(k == 0)
    def _init():
        acc_ref[...] = jnp.zeros_like(acc_ref)

    if x_resident:
        # Whole bf16 X lives in VMEM; slice the current K chunk.
        start = pl.multiple_of(k * tk, 128)
        xk = x_ref[pl.ds(start, tk), :]
    else:
        xk = x_ref[...]

    # AX partial: bf16 operands on the MXU, f32 accumulation.
    acc_ref[...] += jnp.dot(a_ref[...], xk, preferred_element_type=jnp.float32)

    @pl.when(k == pl.num_programs(1) - 1)
    def _finalize():
        gamma = scal_ref[0]
        ax = acc_ref[...]                                 # f32 [tm, Hpad]

        # next_x = gamma * (X - AX)   (X row block kept in f32)
        next_ref[...] = (gamma * (xrow_ref[...] - ax)).astype(next_ref.dtype)

        # out = AX @ M,  M = (1-beta)*I_1 + beta*W  (precomputed on host)
        out_ref[...] = jnp.dot(ax.astype(m_ref.dtype), m_ref[...],
                               preferred_element_type=jnp.float32
                               ).astype(out_ref.dtype)


def drcgc_forward(A, X, I_1, W, gamma, beta, *, tm_target=512, tk_target=2048):
    """Returns (out, next_x) matching DRCGCLayer.forward / self.next_x."""
    N, H = X.shape
    assert A.shape == (N, N) and W.shape == (H, H) and I_1.shape == (H, H)

    f32, bf16 = jnp.float32, jnp.bfloat16

    # Lane-dense feature axis; do NOT pad beyond 128 for small H (HBM-bound).
    Hpad = _round_up(max(H, 128), 128)
    Npad, tm, tk = _plan_tiles(N, tm_target, tk_target)
    pad_n, pad_h = Npad - N, Hpad - H

    # ---- Host prep: cast to bf16 BEFORE padding; skip no-op pads. ----------
    A_bf = A.astype(bf16)
    if pad_n:
        A_bf = jnp.pad(A_bf, ((0, pad_n), (0, pad_n)))

    X_f = X.astype(f32)                                   # f32 copy for next_x
    if pad_n or pad_h:
        X_f = jnp.pad(X_f, ((0, pad_n), (0, pad_h)))
    X_bf = X_f.astype(bf16)                               # bf16 copy for MXU

    # Fold I_1 and beta into one tiny HxH matrix (exact module semantics).
    M = ((1.0 - jnp.asarray(beta, f32)) * I_1.astype(f32)
         + jnp.asarray(beta, f32) * W.astype(f32)).astype(bf16)
    if pad_h:
        M = jnp.pad(M, ((0, pad_h), (0, pad_h)))

    scal = jnp.asarray(gamma, f32).reshape((1,))          # [gamma] in SMEM

    n_row, n_k = Npad // tm, Npad // tk

    # Keep the bf16 X resident in VMEM when it fits (<= 8 MiB double-buffered).
    x_bytes = Npad * Hpad * 2
    x_resident = x_bytes <= 4 * 1024 * 1024
    if x_resident:
        x_spec = pl.BlockSpec((Npad, Hpad), lambda i, k: (0, 0))
    else:
        x_spec = pl.BlockSpec((tk, Hpad), lambda i, k: (k, 0))

    flops = 2 * Npad * Npad * Hpad + 2 * Npad * Hpad * Hpad
    x_read = x_bytes if x_resident else n_row * Npad * Hpad * 2
    bytes_accessed = (Npad * Npad * 2          # A (bf16)
                      + x_read                 # X for matmul (bf16)
                      + Npad * Hpad * 4        # X row blocks (f32)
                      + Hpad * Hpad * 2        # M (bf16)
                      + 2 * Npad * Hpad * 4)   # out + next_x (f32)
    cost = pl.CostEstimate(flops=int(flops), transcendentals=0,
                           bytes_accessed=int(bytes_accessed))

    kernel = functools.partial(drcgc_kernel, tk=tk, x_resident=x_resident)

    out_p, next_p = pl.pallas_call(
        kernel,
        out_shape=(jax.ShapeDtypeStruct((Npad, Hpad), f32),   # out
                   jax.ShapeDtypeStruct((Npad, Hpad), f32)),  # next_x
        grid=(n_row, n_k),
        in_specs=[
            pl.BlockSpec(memory_space=pltpu.SMEM),             # [gamma]
            pl.BlockSpec((tm, tk), lambda i, k: (i, k)),       # A tile (bf16)
            x_spec,                                            # X matmul (bf16)
            pl.BlockSpec((tm, Hpad), lambda i, k: (i, 0)),     # X row    (f32)
            pl.BlockSpec((Hpad, Hpad), lambda i, k: (0, 0)),   # M        (bf16)
        ],
        out_specs=(
            pl.BlockSpec((tm, Hpad), lambda i, k: (i, 0)),
            pl.BlockSpec((tm, Hpad), lambda i, k: (i, 0)),
        ),
        scratch_shapes=[pltpu.VMEM((tm, Hpad), jnp.float32)],  # AX accumulator
        compiler_params=pltpu.CompilerParams(
            dimension_semantics=("parallel", "arbitrary"),
            vmem_limit_bytes=48 * 1024 * 1024),
        cost_estimate=cost,
    )(scal, A_bf, X_bf, X_f, M)

    if pad_n or pad_h:
        return out_p[:N, :H], next_p[:N, :H]
    return out_p, next_p


if __name__ == "__main__":
    # Small shapes implied by the forward: N nodes, nhidden features.
    N, H = 64, 32
    key = jax.random.PRNGKey(0)
    k_a, k_x, k_w, k_g = jax.random.split(key, 4)

    # Dense adjacency-like matrix (torch.spmm(A, X) == A @ X numerically).
    A = jax.random.uniform(k_a, (N, N), jnp.float32)
    X = jax.random.normal(k_x, (N, H), jnp.float32)
    I_1 = jnp.eye(H, dtype=jnp.float32)

    # Parameters (module's reset_parameters zeros them; use deterministic
    # non-zero values so the numerics are non-trivial).
    W = jax.random.normal(k_w, (H, H), jnp.float32) * 0.1
    gamma = jax.random.normal(k_g, (1,), jnp.float32)
    beta = jnp.float32(0.3)

    out, next_x = drcgc_forward(A, X, I_1, W, gamma, beta)
    out = jax.block_until_ready(out)
    next_x = jax.block_until_ready(next_x)

    # 1) Precision-matched reference (bf16 MXU operands, f32 accumulation).
    A_bf = A.astype(jnp.bfloat16)
    X_bf = X.astype(jnp.bfloat16)
    M_ref = ((1.0 - beta) * I_1 + beta * W).astype(jnp.bfloat16)
    AX_m = jnp.dot(A_bf, X_bf, preferred_element_type=jnp.float32)
    ref_next_m = gamma[0] * (X - AX_m)
    ref_out_m = jnp.dot(AX_m.astype(jnp.bfloat16), M_ref,
                        preferred_element_type=jnp.float32)
    assert jnp.allclose(out, ref_out_m, atol=1e-2, rtol=1e-2)
    assert jnp.allclose(next_x, ref_next_m, atol=1e-2, rtol=1e-2)

    # 2) Full-precision module reference (loose tol: bf16 MXU inputs).
    AX = A @ X
    ref_next = gamma[0] * (X - AX)
    ref_out = AX @ ((1.0 - beta) * I_1 + beta * W)
    assert jnp.allclose(out, ref_out, atol=0.3, rtol=0.05)
    assert jnp.allclose(next_x, ref_next, atol=0.3, rtol=0.05)

    print("KERNEL_OK")
</pallas_src>

<mosaic_0001>
module attributes {stable_mosaic.version = 11 : i64} {
  func.func @drcgc_kernel(%arg0: i32, %arg1: i32, %arg2: memref<1xf32, #tpu.memory_space<smem>>, %arg3: memref<128x128xbf16, #tpu.memory_space<vmem>>, %arg4: memref<128x128xbf16, #tpu.memory_space<vmem>>, %arg5: memref<128x128xf32, #tpu.memory_space<vmem>>, %arg6: memref<128x128xbf16, #tpu.memory_space<vmem>>, %arg7: memref<128x128xf32, #tpu.memory_space<vmem>>, %arg8: memref<128x128xf32, #tpu.memory_space<vmem>>, %arg9: memref<128x128xf32, #tpu.memory_space<vmem>>) attributes {dimension_semantics = [#tpu.dimension_semantics<parallel>, #tpu.dimension_semantics<arbitrary>], iteration_bounds = array<i64: 1, 1>, scalar_prefetch = 0 : i64, scratch_operands = 1 : i64, tpu.core_type = #tpu.core_type<tc>, window_params = [{transform_indices = @transform_0, window_bounds = array<i64: 1>}, {transform_indices = @transform_1, window_bounds = array<i64: 128, 128>}, {pipeline_mode = #tpu.pipeline_mode<synchronous>, transform_indices = @transform_2, window_bounds = array<i64: 128, 128>}, {transform_indices = @transform_3, window_bounds = array<i64: 128, 128>}, {pipeline_mode = #tpu.pipeline_mode<synchronous>, transform_indices = @transform_4, window_bounds = array<i64: 128, 128>}, {transform_indices = @transform_5, window_bounds = array<i64: 128, 128>}, {transform_indices = @transform_6, window_bounds = array<i64: 128, 128>}]} {
    %c0_i32 = arith.constant 0 : i32
    %0 = arith.cmpi eq, %arg1, %c0_i32 : i32
    %1 = arith.extui %0 : i1 to i32
    %c0_i32_0 = arith.constant 0 : i32
    %2 = arith.cmpi ne, %1, %c0_i32_0 : i32
    scf.if %2 {
      %cst_9 = arith.constant 0.000000e+00 : f32
      %15 = vector.broadcast %cst_9 : f32 to vector<128x128xf32>
      %c0_10 = arith.constant 0 : index
      %c0_11 = arith.constant 0 : index
      %16 = vector.load %arg9[%c0_10, %c0_11] : memref<128x128xf32, #tpu.memory_space<vmem>>, vector<128x128xf32>
      tpu.vector_store %arg9[%c0_10, %c0_11], %15 {strides = array<i32>} : memref<128x128xf32, #tpu.memory_space<vmem>>, vector<128x128xf32>,
    } else {
    }
    %c128_i32 = arith.constant 128 : i32
    %3 = arith.muli %arg1, %c128_i32 : i32
    %4 = tpu.assume_multiple %3, 128 : i32
    %5 = arith.index_cast %4 : i32 to index
    %c0 = arith.constant 0 : index
    %6 = vector.load %arg4[%5, %c0] : memref<128x128xbf16, #tpu.memory_space<vmem>>, vector<128x128xbf16>
    %c0_1 = arith.constant 0 : index
    %c0_2 = arith.constant 0 : index
    %7 = vector.load %arg9[%c0_1, %c0_2] : memref<128x128xf32, #tpu.memory_space<vmem>>, vector<128x128xf32>
    %c0_3 = arith.constant 0 : index
    %c0_4 = arith.constant 0 : index
    %8 = vector.load %arg3[%c0_3, %c0_4] : memref<128x128xbf16, #tpu.memory_space<vmem>>, vector<128x128xbf16>
    %cst = arith.constant dense<0.000000e+00> : vector<128x128xf32>
    %9 = tpu.matmul %8, %6, %cst {dimension_numbers = #tpu.dot_dimension_numbers<[1], [0], [0], [1], [0, 0, 1, 1], [], []>} : vector<128x128xbf16>, vector<128x128xbf16>, vector<128x128xf32> -> vector<128x128xf32>
    %10 = arith.addf %7, %9 : vector<128x128xf32>
    %c0_5 = arith.constant 0 : index
    %c0_6 = arith.constant 0 : index
    %11 = vector.load %arg9[%c0_5, %c0_6] : memref<128x128xf32, #tpu.memory_space<vmem>>, vector<128x128xf32>
    tpu.vector_store %arg9[%c0_5, %c0_6], %10 {strides = array<i32>} : memref<128x128xf32, #tpu.memory_space<vmem>>, vector<128x128xf32>,
    %c0_i32_7 = arith.constant 0 : i32
    %12 = arith.cmpi eq, %arg1, %c0_i32_7 : i32
    %13 = arith.extui %12 : i1 to i32
    %c0_i32_8 = arith.constant 0 : i32
    %14 = arith.cmpi ne, %13, %c0_i32_8 : i32
    scf.if %14 {
      %c0_9 = arith.constant 0 : index
      %15 = memref.load %arg2[%c0_9] : memref<1xf32, #tpu.memory_space<smem>>
      %c0_10 = arith.constant 0 : index
      %c0_11 = arith.constant 0 : index
      %16 = vector.load %arg9[%c0_10, %c0_11] : memref<128x128xf32, #tpu.memory_space<vmem>>, vector<128x128xf32>
      %c0_12 = arith.constant 0 : index
      %c0_13 = arith.constant 0 : index
      %17 = vector.load %arg5[%c0_12, %c0_13] : memref<128x128xf32, #tpu.memory_space<vmem>>, vector<128x128xf32>
      %18 = arith.subf %17, %16 : vector<128x128xf32>
      %19 = vector.broadcast %15 : f32 to vector<128x128xf32>
      %20 = arith.mulf %19, %18 : vector<128x128xf32>
      %c0_14 = arith.constant 0 : index
      %c0_15 = arith.constant 0 : index
      %21 = vector.load %arg8[%c0_14, %c0_15] : memref<128x128xf32, #tpu.memory_space<vmem>>, vector<128x128xf32>
      tpu.vector_store %arg8[%c0_14, %c0_15], %20 {strides = array<i32>} : memref<128x128xf32, #tpu.memory_space<vmem>>, vector<128x128xf32>,
      %22 = arith.truncf %16 : vector<128x128xf32> to vector<128x128xbf16>
      %c0_16 = arith.constant 0 : index
      %c0_17 = arith.constant 0 : index
      %23 = vector.load %arg6[%c0_16, %c0_17] : memref<128x128xbf16, #tpu.memory_space<vmem>>, vector<128x128xbf16>
      %cst_18 = arith.constant dense<0.000000e+00> : vector<128x128xf32>
      %24 = tpu.matmul %22, %23, %cst_18 {dimension_numbers = #tpu.dot_dimension_numbers<[1], [0], [0], [1], [0, 0, 1, 1], [], []>} : vector<128x128xbf16>, vector<128x128xbf16>, vector<128x128xf32> -> vector<128x128xf32>
      %c0_19 = arith.constant 0 : index
      %c0_20 = arith.constant 0 : index
      %25 = vector.load %arg7[%c0_19, %c0_20] : memref<128x128xf32, #tpu.memory_space<vmem>>, vector<128x128xf32>
      tpu.vector_store %arg7[%c0_19, %c0_20], %24 {strides = array<i32>} : memref<128x128xf32, #tpu.memory_space<vmem>>, vector<128x128xf32>,
    } else {
    }
    return
  }
  func.func @transform_0(%arg0: i32, %arg1: i32) -> i32 {
    %c0_i32 = arith.constant 0 : i32
    %c0_i32_0 = arith.constant 0 : i32
    return %c0_i32 : i32
  }
  func.func @transform_1(%arg0: i32, %arg1: i32) -> (i32, i32) {
    %c0_i32 = arith.constant 0 : i32
    return %arg0, %arg1 : i32, i32
  }
  func.func @transform_2(%arg0: i32, %arg1: i32) -> (i32, i32) {
    %c0_i32 = arith.constant 0 : i32
    %c0_i32_0 = arith.constant 0 : i32
    %c0_i32_1 = arith.constant 0 : i32
    return %c0_i32, %c0_i32_0 : i32, i32
  }
  func.func @transform_3(%arg0: i32, %arg1: i32) -> (i32, i32) {
    %c0_i32 = arith.constant 0 : i32
    %c0_i32_0 = arith.constant 0 : i32
    return %arg0, %c0_i32 : i32, i32
  }
  func.func @transform_4(%arg0: i32, %arg1: i32) -> (i32, i32) {
    %c0_i32 = arith.constant 0 : i32
    %c0_i32_0 = arith.constant 0 : i32
    %c0_i32_1 = arith.constant 0 : i32
    return %c0_i32, %c0_i32_0 : i32, i32
  }
  func.func @transform_5(%arg0: i32, %arg1: i32) -> (i32, i32) {
    %c0_i32 = arith.constant 0 : i32
    %c0_i32_0 = arith.constant 0 : i32
    return %arg0, %c0_i32 : i32, i32
  }
  func.func @transform_6(%arg0: i32, %arg1: i32) -> (i32, i32) {
    %c0_i32 = arith.constant 0 : i32
    %c0_i32_0 = arith.constant 0 : i32
    return %arg0, %c0_i32 : i32, i32
  }
}

</mosaic_0001>

<llo_original>
// kernel: tpu_custom_call.1
$region0: #{tpu_custom_call.1}
  #allocation0 [shape = 'u32[]', space=smem, size = 0x4, offset = 0x4, fixed_abs, tag = 'smem constant byte address 0x4 - core index']
  #allocation1 [shape = 'u32[144,128]{1,0:T(1,128)}', space=vmem, size = 0x12000, scoped, tag = 'internal scratch']
  #allocation2 [shape = 'f32[128,128]{1,0:T(8,128)}', space=vmem, size = 0x10000, scoped, tag = 'scratch operand']
  #allocation3 [shape = 'f32[1]{0:T(128)S(6)}', space=smem, size = 0x200, scoped, tag = 'scoped memory for tpu_custom_call.1']
  %s0 = inlined_call_operand.<no memory space> [shape: f32[1], index: 0, kind: input, shape index: {}]
  %s1 = inlined_call_operand.hbm [shape: bf16[128,128], index: 1, kind: input, shape index: {}]
  %s2 = inlined_call_operand.hbm [shape: bf16[128,128], index: 2, kind: input, shape index: {}]
  %s3 = inlined_call_operand.hbm [shape: f32[128,128], index: 3, kind: input, shape index: {}]
  %s4 = inlined_call_operand.hbm [shape: bf16[128,128], index: 4, kind: input, shape index: {}]
  %s5 = inlined_call_operand.hbm [shape: f32[128,128], index: 5, kind: output, shape index: {0}]
  %s6 = inlined_call_operand.hbm [shape: f32[128,128], index: 6, kind: output, shape index: {1}]
  %7 = xla_tuple %s5, %s6
  %s8 = sld [smem:[#allocation0]]
  $region62: #{tpu_custom_call.1} parent=0
    _
  %s10 = ssub.s32 1, %s8
  %s11 = scalar_select 0, %s10, %s8
  %12 = sst [smem:[#allocation3]] %s0
  $region1: #{tpu_custom_call.1} parent=0
    #allocation4 [shape = 'u8[32768]{0}', space=vmem, size = 0x8000, scoped, tag = 'input window, operand 1, single buffered']
    #allocation5 [shape = 's32[1]{0}', space=sflag, size = 0x4, scoped, tag = 'scoped memory for tpu_custom_call.1']
    #allocation6 [shape = 's32[1]{0}', space=sflag, size = 0x4, scoped, tag = 'scoped memory for tpu_custom_call.1']
    #allocation7 [shape = 'u8[32768]{0}', space=vmem, size = 0x8000, scoped, tag = 'input window, operand 2, single buffered']
    #allocation8 [shape = 's32[1]{0}', space=sflag, size = 0x4, scoped, tag = 'scoped memory for tpu_custom_call.1']
    #allocation9 [shape = 'u8[65536]{0}', space=vmem, size = 0x10000, scoped, tag = 'input window, operand 3, single buffered']
    #allocation10 [shape = 'u8[32768]{0}', space=vmem, size = 0x8000, scoped, tag = 'input window, operand 4, single buffered']
    #allocation11 [shape = 's32[1]{0}', space=sflag, size = 0x4, scoped, tag = 'scoped memory for tpu_custom_call.1']
    #allocation12 [shape = 'u8[65536]{0}', space=vmem, size = 0x10000, scoped, tag = 'output window, operand 0, single buffered']
    #allocation13 [shape = 'u8[65536]{0}', space=vmem, size = 0x10000, scoped, tag = 'output window, operand 1, single buffered']
    #allocation14 [shape = 's32[1]{0}', space=sflag, size = 0x4, scoped, tag = 'scoped memory for tpu_custom_call.1']
    %13 = vsyncpa [#allocation5], 0
    %14 = vsyncpa [#allocation8], 0
    %15 = vsyncpa [#allocation11], 0
    %16 = vsyncpa [#allocation6], 0
    %17 = vsyncpa [#allocation14], 0
    // Predicated region
    $region2: #{tpu_custom_call.1} parent=1 // pred_check
      _
    $region3: #{tpu_custom_call.1} parent=1 // pred_check_branch
      %19 = sbr.rel (0) target = $region5
    $region4: #{tpu_custom_call.1} parent=1 // pred_region
      _
    $region5: #{tpu_custom_call.1} parent=1 // pred_fallthru
      _
    // Predicated region
    $region6: #{tpu_custom_call.1} parent=1 // pred_check
      _
    $region7: #{tpu_custom_call.1} parent=1 // pred_check_branch
      %21 = sbr.rel (0) target = $region9
    $region8: #{tpu_custom_call.1} parent=1 // pred_region
      %s23 = ssub.s32 1024, 1024
      %24 = vsyncadd [#allocation5], %s23
      %s25 = sshll.u32 [#allocation4], 4
      %s26 = int_to_ptr.vmem [resolvable:$true] %s25
      %31 = dma.hbm_to_vmem [thread:$0]  %s1, 1024, %s26, [#allocation5], 64, 64, 4
    $region9: #{tpu_custom_call.1} parent=1 // pred_fallthru
      _
    // Predicated region
    $region10: #{tpu_custom_call.1} parent=1 // pred_check
      _
    $region11: #{tpu_custom_call.1} parent=1 // pred_check_branch
      %33 = sbr.rel (0) target = $region13
    $region12: #{tpu_custom_call.1} parent=1 // pred_region
      %s35 = ssub.s32 1024, 1024
      %36 = vsyncadd [#allocation8], %s35
      %s37 = sshll.u32 [#allocation7], 4
      %s38 = int_to_ptr.vmem [resolvable:$true] %s37
      %43 = dma.hbm_to_vmem [thread:$0]  %s2, 1024, %s38, [#allocation8], 64, 64, 4
    $region13: #{tpu_custom_call.1} parent=1 // pred_fallthru
      _
    // Predicated region
    $region14: #{tpu_custom_call.1} parent=1 // pred_check
      _
    $region15: #{tpu_custom_call.1} parent=1 // pred_check_branch
      %45 = sbr.rel (0) target = $region17
    $region16: #{tpu_custom_call.1} parent=1 // pred_region
      %s47 = ssub.s32 2048, 2048
      %48 = vsyncadd [#allocation8], %s47
      %s49 = sshll.u32 [#allocation9], 4
      %s50 = int_to_ptr.vmem [resolvable:$true] %s49
      %55 = dma.hbm_to_vmem [thread:$0]  %s3, 2048, %s50, [#allocation8], 128, 128, 8
    $region17: #{tpu_custom_call.1} parent=1 // pred_fallthru
      _
    // Predicated region
    $region18: #{tpu_custom_call.1} parent=1 // pred_check
      _
    $region19: #{tpu_custom_call.1} parent=1 // pred_check_branch
      %57 = sbr.rel (0) target = $region21
    $region20: #{tpu_custom_call.1} parent=1 // pred_region
      %s59 = ssub.s32 1024, 1024
      %60 = vsyncadd [#allocation11], %s59
      %s61 = sshll.u32 [#allocation10], 4
      %s62 = int_to_ptr.vmem [resolvable:$true] %s61
      %67 = dma.hbm_to_vmem [thread:$0]  %s4, 1024, %s62, [#allocation11], 64, 64, 4
    $region21: #{tpu_custom_call.1} parent=1 // pred_fallthru
      _
    // Predicated region
    $region22: #{tpu_custom_call.1} parent=1 // pred_check
      _
    $region23: #{tpu_custom_call.1} parent=1 // pred_check_branch
      %69 = sbr.rel (0) target = $region25
    $region24: #{tpu_custom_call.1} parent=1 // pred_region
      %70 = dma.done [#allocation5], 1024
    $region25: #{tpu_custom_call.1} parent=1 // pred_fallthru
      _
    // Predicated region
    $region26: #{tpu_custom_call.1} parent=1 // pred_check
      _
    $region27: #{tpu_custom_call.1} parent=1 // pred_check_branch
      %72 = sbr.rel (0) target = $region29
    $region28: #{tpu_custom_call.1} parent=1 // pred_region
      %73 = dma.done [#allocation8], 1024
    $region29: #{tpu_custom_call.1} parent=1 // pred_fallthru
      _
    // Predicated region
    $region30: #{tpu_custom_call.1} parent=1 // pred_check
      _
    $region31: #{tpu_custom_call.1} parent=1 // pred_check_branch
      %75 = sbr.rel (0) target = $region33
    $region32: #{tpu_custom_call.1} parent=1 // pred_region
      %76 = dma.done [#allocation8], 2048
    $region33: #{tpu_custom_call.1} parent=1 // pred_fallthru
      _
    // Predicated region
    $region34: #{tpu_custom_call.1} parent=1 // pred_check
      _
    $region35: #{tpu_custom_call.1} parent=1 // pred_check_branch
      %78 = sbr.rel (0) target = $region37
    $region36: #{tpu_custom_call.1} parent=1 // pred_region
      %79 = dma.done [#allocation11], 1024
    $region37: #{tpu_custom_call.1} parent=1 // pred_fallthru
      _
    %p81 = scmp.eq.s32.totalorder 0, 0
    // Predicated region
    $region38: #{tpu_custom_call.1} parent=1 // pred_check
      %p82 = pneg %p81
    $region39: #{tpu_custom_call.1} parent=1 // pred_check_branch
      %84 = sbr.rel (%p82) target = $region41
    $region40: #{tpu_custom_call.1} parent=1 // pred_region
      %85 = vst [vmem:[#allocation2] sm:$0xff] 0.0
      %86 = vst [vmem:[#allocation2 + $0x8] sm:$0xff] 0.0
      %87 = vst [vmem:[#allocation2 + $0x10] sm:$0xff] 0.0
      %88 = vst [vmem:[#allocation2 + $0x18] sm:$0xff] 0.0
      %89 = vst [vmem:[#allocation2 + $0x20] sm:$0xff] 0.0
      %90 = vst [vmem:[#allocation2 + $0x28] sm:$0xff] 0.0
      %91 = vst [vmem:[#allocation2 + $0x30] sm:$0xff] 0.0
      %92 = vst [vmem:[#allocation2 + $0x38] sm:$0xff] 0.0
      %93 = vst [vmem:[#allocation2 + $0x40] sm:$0xff] 0.0
      %94 = vst [vmem:[#allocation2 + $0x48] sm:$0xff] 0.0
      %95 = vst [vmem:[#allocation2 + $0x50] sm:$0xff] 0.0
      %96 = vst [vmem:[#allocation2 + $0x58] sm:$0xff] 0.0
      %97 = vst [vmem:[#allocation2 + $0x60] sm:$0xff] 0.0
      %98 = vst [vmem:[#allocation2 + $0x68] sm:$0xff] 0.0
      %99 = vst [vmem:[#allocation2 + $0x70] sm:$0xff] 0.0
      %100 = vst [vmem:[#allocation2 + $0x78] sm:$0xff] 0.0
    $region41: #{tpu_custom_call.1} parent=1 // pred_fallthru
      _
    %s101 = smul.u32 0, 128
    %s102 = sshra.s32 %s101, 3
    %s103 = sand.u32 %s101, 7
    %s104 = smul.addr %s102, 4
    %s105 = scalar_lea.vmem [#allocation7], %s104
    %v106 = vld [vmem:[%s105] sm:$0xf]
    %v107 = vld [vmem:[%s105 + $0x4] sm:$0xf]
    %v108 = vld [vmem:[%s105 + $0x8] sm:$0xf]
    %v109 = vld [vmem:[%s105 + $0xc] sm:$0xf]
    %v110 = vld [vmem:[%s105 + $0x10] sm:$0xf]
    %v111 = vld [vmem:[%s105 + $0x14] sm:$0xf]
    %v112 = vld [vmem:[%s105 + $0x18] sm:$0xf]
    %v113 = vld [vmem:[%s105 + $0x1c] sm:$0xf]
    %v114 = vld [vmem:[%s105 + $0x20] sm:$0xf]
    %v115 = vld [vmem:[%s105 + $0x24] sm:$0xf]
    %v116 = vld [vmem:[%s105 + $0x28] sm:$0xf]
    %v117 = vld [vmem:[%s105 + $0x2c] sm:$0xf]
    %v118 = vld [vmem:[%s105 + $0x30] sm:$0xf]
    %v119 = vld [vmem:[%s105 + $0x34] sm:$0xf]
    %v120 = vld [vmem:[%s105 + $0x38] sm:$0xf]
    %v121 = vld [vmem:[%s105 + $0x3c] sm:$0xf]
    %v122 = vld [vmem:[#allocation2] sm:$0xff]
    %v123 = vld [vmem:[#allocation2 + $0x8] sm:$0xff]
    %v124 = vld [vmem:[#allocation2 + $0x10] sm:$0xff]
    %v125 = vld [vmem:[#allocation2 + $0x18] sm:$0xff]
    %v126 = vld [vmem:[#allocation2 + $0x20] sm:$0xff]
    %v127 = vld [vmem:[#allocation2 + $0x28] sm:$0xff]
    %v128 = vld [vmem:[#allocation2 + $0x30] sm:$0xff]
    %v129 = vld [vmem:[#allocation2 + $0x38] sm:$0xff]
    %v130 = vld [vmem:[#allocation2 + $0x40] sm:$0xff]
    %v131 = vld [vmem:[#allocation2 + $0x48] sm:$0xff]
    %v132 = vld [vmem:[#allocation2 + $0x50] sm:$0xff]
    %v133 = vld [vmem:[#allocation2 + $0x58] sm:$0xff]
    %v134 = vld [vmem:[#allocation2 + $0x60] sm:$0xff]
    %v135 = vld [vmem:[#allocation2 + $0x68] sm:$0xff]
    %v136 = vld [vmem:[#allocation2 + $0x70] sm:$0xff]
    %v137 = vld [vmem:[#allocation2 + $0x78] sm:$0xff]
    %v138 = vld [vmem:[#allocation4] sm:$0xf]
    %v139 = vld [vmem:[#allocation4 + $0x4] sm:$0xf]
    %v140 = vld [vmem:[#allocation4 + $0x8] sm:$0xf]
    %v141 = vld [vmem:[#allocation4 + $0xc] sm:$0xf]
    %v142 = vld [vmem:[#allocation4 + $0x10] sm:$0xf]
    %v143 = vld [vmem:[#allocation4 + $0x14] sm:$0xf]
    %v144 = vld [vmem:[#allocation4 + $0x18] sm:$0xf]
    %v145 = vld [vmem:[#allocation4 + $0x1c] sm:$0xf]
    %v146 = vld [vmem:[#allocation4 + $0x20] sm:$0xf]
    %v147 = vld [vmem:[#allocation4 + $0x24] sm:$0xf]
    %v148 = vld [vmem:[#allocation4 + $0x28] sm:$0xf]
    %v149 = vld [vmem:[#allocation4 + $0x2c] sm:$0xf]
    %v150 = vld [vmem:[#allocation4 + $0x30] sm:$0xf]
    %v151 = vld [vmem:[#allocation4 + $0x34] sm:$0xf]
    %v152 = vld [vmem:[#allocation4 + $0x38] sm:$0xf]
    %v153 = vld [vmem:[#allocation4 + $0x3c] sm:$0xf]
    %v170 = vunpack.c.l.b16 %v138
    %v171 = vunpack.c.l.b16 %v139
    %v172 = vunpack.c.l.b16 %v140
    %v173 = vunpack.c.l.b16 %v141
    %v174 = vunpack.c.l.b16 %v142
    %v175 = vunpack.c.l.b16 %v143
    %v176 = vunpack.c.l.b16 %v144
    %v177 = vunpack.c.l.b16 %v145
    %v178 = vunpack.c.l.b16 %v146
    %v179 = vunpack.c.l.b16 %v147
    %v180 = vunpack.c.l.b16 %v148
    %v181 = vunpack.c.l.b16 %v149
    %v182 = vunpack.c.l.b16 %v150
    %v183 = vunpack.c.l.b16 %v151
    %v184 = vunpack.c.l.b16 %v152
    %v185 = vunpack.c.l.b16 %v153
    %v186 = vpack.c.b16 %v171, %v170
    %v187 = vpack.c.b16 %v173, %v172
    %v188 = vpack.c.b16 %v175, %v174
    %v189 = vpack.c.b16 %v177, %v176
    %v190 = vpack.c.b16 %v179, %v178
    %v191 = vpack.c.b16 %v181, %v180
    %v192 = vpack.c.b16 %v183, %v182
    %v193 = vpack.c.b16 %v185, %v184
    %v218 = vunpack.c.l.b16 %v106
    %v219 = vunpack.c.l.b16 %v107
    %v220 = vunpack.c.l.b16 %v108
    %v221 = vunpack.c.l.b16 %v109
    %v222 = vunpack.c.l.b16 %v110
    %v223 = vunpack.c.l.b16 %v111
    %v224 = vunpack.c.l.b16 %v112
    %v225 = vunpack.c.l.b16 %v113
    %v226 = vunpack.c.l.b16 %v114
    %v227 = vunpack.c.l.b16 %v115
    %v228 = vunpack.c.l.b16 %v116
    %v229 = vunpack.c.l.b16 %v117
    %v230 = vunpack.c.l.b16 %v118
    %v231 = vunpack.c.l.b16 %v119
    %v232 = vunpack.c.l.b16 %v120
    %v233 = vunpack.c.l.b16 %v121
    %v234 = vpack.c.b16 %v219, %v218
    %v235 = vpack.c.b16 %v221, %v220
    %v236 = vpack.c.b16 %v223, %v222
    %v237 = vpack.c.b16 %v225, %v224
    %v238 = vpack.c.b16 %v227, %v226
    %v239 = vpack.c.b16 %v229, %v228
    %v240 = vpack.c.b16 %v231, %v230
    %v241 = vpack.c.b16 %v233, %v232
    %250 = vmatprep.subr.bf16.mxu0 0
    %251 = vmatpush1.bf16.msra.mxu0 %v234
    %252 = vmatprep.subr.bf16.mxu0 0
    %253 = vmatpush1.bf16.msra.mxu0 %v235
    %254 = vmatprep.subr.bf16.mxu0 0
    %255 = vmatpush1.bf16.msra.mxu0 %v236
    %256 = vmatprep.subr.bf16.mxu0 0
    %257 = vmatpush1.bf16.msra.mxu0 %v237
    %258 = vmatprep.subr.bf16.mxu0 0
    %259 = vmatpush1.bf16.msra.mxu0 %v238
    %260 = vmatprep.subr.bf16.mxu0 0
    %261 = vmatpush1.bf16.msra.mxu0 %v239
    %262 = vmatprep.subr.bf16.mxu0 0
    %263 = vmatpush1.bf16.msra.mxu0 %v240
    %264 = vmatprep.subr.bf16.mxu0 0
    %265 = vmatpush1.bf16.msra.mxu0 %v241
    %266 = vmatprep.subr.bf16.mxu0 0
    %267 = vmatpush1.bf16.msra.mxu0 0
    %268 = vmatprep.subr.bf16.mxu0 0
    %269 = vmatpush1.bf16.msra.mxu0 0
    %270 = vmatprep.subr.bf16.mxu0 0
    %271 = vmatpush1.bf16.msra.mxu0 0
    %272 = vmatprep.subr.bf16.mxu0 0
    %273 = vmatpush1.bf16.msra.mxu0 0
    %274 = vmatprep.subr.bf16.mxu0 0
    %275 = vmatpush1.bf16.msra.mxu0 0
    %276 = vmatprep.subr.bf16.mxu0 0
    %277 = vmatpush1.bf16.msra.mxu0 0
    %278 = vmatprep.subr.bf16.mxu0 0
    %279 = vmatpush1.bf16.msra.mxu0 0
    %280 = vmatprep.subr.bf16.mxu0 0
    %281 = vmatpush1.bf16.msra.mxu0 0
    %282 = vmatprep.mubr.bf16.mxu0 0
    %283 = vmatmul.mubr.bf16.gmra.mrb[0].mxu0 %v186
    %v284 = vpop.f32.mrb[0].mxu0
    %v285 = vadd.f32 0.0, %v284
    %v286 = vpop.f32.mrb[0].mxu0
    %v287 = vpop.f32.mrb[0].mxu0
    %v288 = vadd.f32 0.0, %v287
    %v289 = vpop.f32.mrb[0].mxu0
    %290 = vmatprep.mubr.bf16.mxu0 0
    %291 = vmatmul.mubr.bf16.gmra.mrb[0].mxu0 %v187
    %v292 = vpop.f32.mrb[0].mxu0
    %v293 = vadd.f32 0.0, %v292
    %v294 = vpop.f32.mrb[0].mxu0
    %v295 = vpop.f32.mrb[0].mxu0
    %v296 = vadd.f32 0.0, %v295
    %v297 = vpop.f32.mrb[0].mxu0
    %298 = vmatprep.mubr.bf16.mxu0 0
    %299 = vmatmul.mubr.bf16.gmra.mrb[0].mxu0 %v188
    %v300 = vpop.f32.mrb[0].mxu0
    %v301 = vadd.f32 0.0, %v300
    %v302 = vpop.f32.mrb[0].mxu0
    %v303 = vpop.f32.mrb[0].mxu0
    %v304 = vadd.f32 0.0, %v303
    %v305 = vpop.f32.mrb[0].mxu0
    %306 = vmatprep.mubr.bf16.mxu0 0
    %307 = vmatmul.mubr.bf16.gmra.mrb[0].mxu0 %v189
    %v308 = vpop.f32.mrb[0].mxu0
    %v309 = vadd.f32 0.0, %v308
    %v310 = vpop.f32.mrb[0].mxu0
    %v311 = vpop.f32.mrb[0].mxu0
    %v312 = vadd.f32 0.0, %v311
    %v313 = vpop.f32.mrb[0].mxu0
    %314 = vmatprep.mubr.bf16.mxu0 0
    %315 = vmatmul.mubr.bf16.gmra.mrb[0].mxu0 %v190
    %v316 = vpop.f32.mrb[0].mxu0
    %v317 = vadd.f32 0.0, %v316
    %v318 = vpop.f32.mrb[0].mxu0
    %v319 = vpop.f32.mrb[0].mxu0
    %v320 = vadd.f32 0.0, %v319
    %v321 = vpop.f32.mrb[0].mxu0
    %322 = vmatprep.mubr.bf16.mxu0 0
    %323 = vmatmul.mubr.bf16.gmra.mrb[0].mxu0 %v191
    %v324 = vpop.f32.mrb[0].mxu0
    %v325 = vadd.f32 0.0, %v324
    %v326 = vpop.f32.mrb[0].mxu0
    %v327 = vpop.f32.mrb[0].mxu0
    %v328 = vadd.f32 0.0, %v327
    %v329 = vpop.f32.mrb[0].mxu0
    %330 = vmatprep.mubr.bf16.mxu0 0
    %331 = vmatmul.mubr.bf16.gmra.mrb[0].mxu0 %v192
    %v332 = vpop.f32.mrb[0].mxu0
    %v333 = vadd.f32 0.0, %v332
    %v334 = vpop.f32.mrb[0].mxu0
    %v335 = vpop.f32.mrb[0].mxu0
    %v336 = vadd.f32 0.0, %v335
    %v337 = vpop.f32.mrb[0].mxu0
    %338 = vmatprep.mubr.bf16.mxu0 0
    %339 = vmatmul.mubr.bf16.gmra.mrb[0].mxu0 %v193
    %v340 = vpop.f32.mrb[0].mxu0
    %v341 = vadd.f32 0.0, %v340
    %v342 = vpop.f32.mrb[0].mxu0
    %v343 = vpop.f32.mrb[0].mxu0
    %v344 = vadd.f32 0.0, %v343
    %v345 = vpop.f32.mrb[0].mxu0
    %346 = vdwg.mxu0
    %v347 = vadd.f32 %v122, %v285
    %v348 = vadd.f32 %v123, %v288
    %v349 = vadd.f32 %v124, %v293
    %v350 = vadd.f32 %v125, %v296
    %v351 = vadd.f32 %v126, %v301
    %v352 = vadd.f32 %v127, %v304
    %v353 = vadd.f32 %v128, %v309
    %v354 = vadd.f32 %v129, %v312
    %v355 = vadd.f32 %v130, %v317
    %v356 = vadd.f32 %v131, %v320
    %v357 = vadd.f32 %v132, %v325
    %v358 = vadd.f32 %v133, %v328
    %v359 = vadd.f32 %v134, %v333
    %v360 = vadd.f32 %v135, %v336
    %v361 = vadd.f32 %v136, %v341
    %v362 = vadd.f32 %v137, %v344
    %363 = vst [vmem:[#allocation2] sm:$0xff] %v347
    %364 = vst [vmem:[#allocation2 + $0x8] sm:$0xff] %v348
    %365 = vst [vmem:[#allocation2 + $0x10] sm:$0xff] %v349
    %366 = vst [vmem:[#allocation2 + $0x18] sm:$0xff] %v350
    %367 = vst [vmem:[#allocation2 + $0x20] sm:$0xff] %v351
    %368 = vst [vmem:[#allocation2 + $0x28] sm:$0xff] %v352
    %369 = vst [vmem:[#allocation2 + $0x30] sm:$0xff] %v353
    %370 = vst [vmem:[#allocation2 + $0x38] sm:$0xff] %v354
    %371 = vst [vmem:[#allocation2 + $0x40] sm:$0xff] %v355
    %372 = vst [vmem:[#allocation2 + $0x48] sm:$0xff] %v356
    %373 = vst [vmem:[#allocation2 + $0x50] sm:$0xff] %v357
    %374 = vst [vmem:[#allocation2 + $0x58] sm:$0xff] %v358
    %375 = vst [vmem:[#allocation2 + $0x60] sm:$0xff] %v359
    %376 = vst [vmem:[#allocation2 + $0x68] sm:$0xff] %v360
    %377 = vst [vmem:[#allocation2 + $0x70] sm:$0xff] %v361
    %378 = vst [vmem:[#allocation2 + $0x78] sm:$0xff] %v362
    // Predicated region
    $region42: #{tpu_custom_call.1} parent=1 // pred_check
      %p379 = pneg %p81
    $region43: #{tpu_custom_call.1} parent=1 // pred_check_branch
      %381 = sbr.rel (%p379) target = $region45
    $region44: #{tpu_custom_call.1} parent=1 // pred_region
      %s382 = sld [smem:[#allocation3]]
      %v383 = vld [vmem:[#allocation2] sm:$0xff]
      %v384 = vld [vmem:[#allocation2 + $0x8] sm:$0xff]
      %v385 = vld [vmem:[#allocation2 + $0x10] sm:$0xff]
      %v386 = vld [vmem:[#allocation2 + $0x18] sm:$0xff]
      %v387 = vld [vmem:[#allocation2 + $0x20] sm:$0xff]
      %v388 = vld [vmem:[#allocation2 + $0x28] sm:$0xff]
      %v389 = vld [vmem:[#allocation2 + $0x30] sm:$0xff]
      %v390 = vld [vmem:[#allocation2 + $0x38] sm:$0xff]
      %v391 = vld [vmem:[#allocation2 + $0x40] sm:$0xff]
      %v392 = vld [vmem:[#allocation2 + $0x48] sm:$0xff]
      %v393 = vld [vmem:[#allocation2 + $0x50] sm:$0xff]
      %v394 = vld [vmem:[#allocation2 + $0x58] sm:$0xff]
      %v395 = vld [vmem:[#allocation2 + $0x60] sm:$0xff]
      %v396 = vld [vmem:[#allocation2 + $0x68] sm:$0xff]
      %v397 = vld [vmem:[#allocation2 + $0x70] sm:$0xff]
      %v398 = vld [vmem:[#allocation2 + $0x78] sm:$0xff]
      %v399 = vld [vmem:[#allocation9] sm:$0xff]
      %v400 = vld [vmem:[#allocation9 + $0x8] sm:$0xff]
      %v401 = vld [vmem:[#allocation9 + $0x10] sm:$0xff]
      %v402 = vld [vmem:[#allocation9 + $0x18] sm:$0xff]
      %v403 = vld [vmem:[#allocation9 + $0x20] sm:$0xff]
      %v404 = vld [vmem:[#allocation9 + $0x28] sm:$0xff]
      %v405 = vld [vmem:[#allocation9 + $0x30] sm:$0xff]
      %v406 = vld [vmem:[#allocation9 + $0x38] sm:$0xff]
      %v407 = vld [vmem:[#allocation9 + $0x40] sm:$0xff]
      %v408 = vld [vmem:[#allocation9 + $0x48] sm:$0xff]
      %v409 = vld [vmem:[#allocation9 + $0x50] sm:$0xff]
      %v410 = vld [vmem:[#allocation9 + $0x58] sm:$0xff]
      %v411 = vld [vmem:[#allocation9 + $0x60] sm:$0xff]
      %v412 = vld [vmem:[#allocation9 + $0x68] sm:$0xff]
      %v413 = vld [vmem:[#allocation9 + $0x70] sm:$0xff]
      %v414 = vld [vmem:[#allocation9 + $0x78] sm:$0xff]
      %v415 = vsub.f32 %v399, %v383
      %v416 = vsub.f32 %v400, %v384
      %v417 = vsub.f32 %v401, %v385
      %v418 = vsub.f32 %v402, %v386
      %v419 = vsub.f32 %v403, %v387
      %v420 = vsub.f32 %v404, %v388
      %v421 = vsub.f32 %v405, %v389
      %v422 = vsub.f32 %v406, %v390
      %v423 = vsub.f32 %v407, %v391
      %v424 = vsub.f32 %v408, %v392
      %v425 = vsub.f32 %v409, %v393
      %v426 = vsub.f32 %v410, %v394
      %v427 = vsub.f32 %v411, %v395
      %v428 = vsub.f32 %v412, %v396
      %v429 = vsub.f32 %v413, %v397
      %v430 = vsub.f32 %v414, %v398
      %v431 = vstv %s382
      %v432 = vmul.f32 %v431, %v415
      %v433 = vmul.f32 %v431, %v416
      %v434 = vmul.f32 %v431, %v417
      %v435 = vmul.f32 %v431, %v418
      %v436 = vmul.f32 %v431, %v419
      %v437 = vmul.f32 %v431, %v420
      %v438 = vmul.f32 %v431, %v421
      %v439 = vmul.f32 %v431, %v422
      %v440 = vmul.f32 %v431, %v423
      %v441 = vmul.f32 %v431, %v424
      %v442 = vmul.f32 %v431, %v425
      %v443 = vmul.f32 %v431, %v426
      %v444 = vmul.f32 %v431, %v427
      %v445 = vmul.f32 %v431, %v428
      %v446 = vmul.f32 %v431, %v429
      %v447 = vmul.f32 %v431, %v430
      %448 = vst [vmem:[#allocation13] sm:$0xff] %v432
      %449 = vst [vmem:[#allocation13 + $0x8] sm:$0xff] %v433
      %450 = vst [vmem:[#allocation13 + $0x10] sm:$0xff] %v434
      %451 = vst [vmem:[#allocation13 + $0x18] sm:$0xff] %v435
      %452 = vst [vmem:[#allocation13 + $0x20] sm:$0xff] %v436
      %453 = vst [vmem:[#allocation13 + $0x28] sm:$0xff] %v437
      %454 = vst [vmem:[#allocation13 + $0x30] sm:$0xff] %v438
      %455 = vst [vmem:[#allocation13 + $0x38] sm:$0xff] %v439
      %456 = vst [vmem:[#allocation13 + $0x40] sm:$0xff] %v440
      %457 = vst [vmem:[#allocation13 + $0x48] sm:$0xff] %v441
      %458 = vst [vmem:[#allocation13 + $0x50] sm:$0xff] %v442
      %459 = vst [vmem:[#allocation13 + $0x58] sm:$0xff] %v443
      %460 = vst [vmem:[#allocation13 + $0x60] sm:$0xff] %v444
      %461 = vst [vmem:[#allocation13 + $0x68] sm:$0xff] %v445
      %462 = vst [vmem:[#allocation13 + $0x70] sm:$0xff] %v446
      %463 = vst [vmem:[#allocation13 + $0x78] sm:$0xff] %v447
      %v464 = vpack.c.bf16 %v384, %v383
      %v465 = vpack.c.bf16 %v386, %v385
      %v466 = vpack.c.bf16 %v388, %v387
      %v467 = vpack.c.bf16 %v390, %v389
      %v468 = vpack.c.bf16 %v392, %v391
      %v469 = vpack.c.bf16 %v394, %v393
      %v470 = vpack.c.bf16 %v396, %v395
      %v471 = vpack.c.bf16 %v398, %v397
      %v472 = vld [vmem:[#allocation10] sm:$0xf]
      %v473 = vld [vmem:[#allocation10 + $0x4] sm:$0xf]
      %v474 = vld [vmem:[#allocation10 + $0x8] sm:$0xf]
      %v475 = vld [vmem:[#allocation10 + $0xc] sm:$0xf]
      %v476 = vld [vmem:[#allocation10 + $0x10] sm:$0xf]
      %v477 = vld [vmem:[#allocation10 + $0x14] sm:$0xf]
      %v478 = vld [vmem:[#allocation10 + $0x18] sm:$0xf]
      %v479 = vld [vmem:[#allocation10 + $0x1c] sm:$0xf]
      %v480 = vld [vmem:[#allocation10 + $0x20] sm:$0xf]
      %v481 = vld [vmem:[#allocation10 + $0x24] sm:$0xf]
      %v482 = vld [vmem:[#allocation10 + $0x28] sm:$0xf]
      %v483 = vld [vmem:[#allocation10 + $0x2c] sm:$0xf]
      %v484 = vld [vmem:[#allocation10 + $0x30] sm:$0xf]
      %v485 = vld [vmem:[#allocation10 + $0x34] sm:$0xf]
      %v486 = vld [vmem:[#allocation10 + $0x38] sm:$0xf]
      %v487 = vld [vmem:[#allocation10 + $0x3c] sm:$0xf]
      %v504 = vunpack.c.l.b16 %v472
      %v505 = vunpack.c.l.b16 %v473
      %v506 = vunpack.c.l.b16 %v474
      %v507 = vunpack.c.l.b16 %v475
      %v508 = vunpack.c.l.b16 %v476
      %v509 = vunpack.c.l.b16 %v477
      %v510 = vunpack.c.l.b16 %v478
      %v511 = vunpack.c.l.b16 %v479
      %v512 = vunpack.c.l.b16 %v480
      %v513 = vunpack.c.l.b16 %v481
      %v514 = vunpack.c.l.b16 %v482
      %v515 = vunpack.c.l.b16 %v483
      %v516 = vunpack.c.l.b16 %v484
      %v517 = vunpack.c.l.b16 %v485
      %v518 = vunpack.c.l.b16 %v486
      %v519 = vunpack.c.l.b16 %v487
      %v520 = vpack.c.b16 %v505, %v504
      %v521 = vpack.c.b16 %v507, %v506
      %v522 = vpack.c.b16 %v509, %v508
      %v523 = vpack.c.b16 %v511, %v510
      %v524 = vpack.c.b16 %v513, %v512
      %v525 = vpack.c.b16 %v515, %v514
      %v526 = vpack.c.b16 %v517, %v516
      %v527 = vpack.c.b16 %v519, %v518
      %536 = vmatprep.subr.bf16.mxu0 0
      %537 = vmatpush1.bf16.msra.mxu0 %v520
      %538 = vmatprep.subr.bf16.mxu0 0
      %539 = vmatpush1.bf16.msra.mxu0 %v521
      %540 = vmatprep.subr.bf16.mxu0 0
      %541 = vmatpush1.bf16.msra.mxu0 %v522
      %542 = vmatprep.subr.bf16.mxu0 0
      %543 = vmatpush1.bf16.msra.mxu0 %v523
      %544 = vmatprep.subr.bf16.mxu0 0
      %545 = vmatpush1.bf16.msra.mxu0 %v524
      %546 = vmatprep.subr.bf16.mxu0 0
      %547 = vmatpush1.bf16.msra.mxu0 %v525
      %548 = vmatprep.subr.bf16.mxu0 0
      %549 = vmatpush1.bf16.msra.mxu0 %v526
      %550 = vmatprep.subr.bf16.mxu0 0
      %551 = vmatpush1.bf16.msra.mxu0 %v527
      %552 = vmatprep.subr.bf16.mxu0 0
      %553 = vmatpush1.bf16.msra.mxu0 0
      %554 = vmatprep.subr.bf16.mxu0 0
      %555 = vmatpush1.bf16.msra.mxu0 0
      %556 = vmatprep.subr.bf16.mxu0 0
      %557 = vmatpush1.bf16.msra.mxu0 0
      %558 = vmatprep.subr.bf16.mxu0 0
      %559 = vmatpush1.bf16.msra.mxu0 0
      %560 = vmatprep.subr.bf16.mxu0 0
      %561 = vmatpush1.bf16.msra.mxu0 0
      %562 = vmatprep.subr.bf16.mxu0 0
      %563 = vmatpush1.bf16.msra.mxu0 0
      %564 = vmatprep.subr.bf16.mxu0 0
      %565 = vmatpush1.bf16.msra.mxu0 0
      %566 = vmatprep.subr.bf16.mxu0 0
      %567 = vmatpush1.bf16.msra.mxu0 0
      %568 = vmatprep.mubr.bf16.mxu0 0
      %569 = vmatmul.mubr.bf16.gmra.mrb[0].mxu0 %v464
      %v570 = vpop.f32.mrb[0].mxu0
      %v571 = vadd.f32 0.0, %v570
      %v572 = vpop.f32.mrb[0].mxu0
      %v573 = vpop.f32.mrb[0].mxu0
      %v574 = vadd.f32 0.0, %v573
      %v575 = vpop.f32.mrb[0].mxu0
      %576 = vmatprep.mubr.bf16.mxu0 0
      %577 = vmatmul.mubr.bf16.gmra.mrb[0].mxu0 %v465
      %v578 = vpop.f32.mrb[0].mxu0
      %v579 = vadd.f32 0.0, %v578
      %v580 = vpop.f32.mrb[0].mxu0
      %v581 = vpop.f32.mrb[0].mxu0
      %v582 = vadd.f32 0.0, %v581
      %v583 = vpop.f32.mrb[0].mxu0
      %584 = vmatprep.mubr.bf16.mxu0 0
      %585 = vmatmul.mubr.bf16.gmra.mrb[0].mxu0 %v466
      %v586 = vpop.f32.mrb[0].mxu0
      %v587 = vadd.f32 0.0, %v586
      %v588 = vpop.f32.mrb[0].mxu0
      %v589 = vpop.f32.mrb[0].mxu0
      %v590 = vadd.f32 0.0, %v589
      %v591 = vpop.f32.mrb[0].mxu0
      %592 = vmatprep.mubr.bf16.mxu0 0
      %593 = vmatmul.mubr.bf16.gmra.mrb[0].mxu0 %v467
      %v594 = vpop.f32.mrb[0].mxu0
      %v595 = vadd.f32 0.0, %v594
      %v596 = vpop.f32.mrb[0].mxu0
      %v597 = vpop.f32.mrb[0].mxu0
      %v598 = vadd.f32 0.0, %v597
      %v599 = vpop.f32.mrb[0].mxu0
      %600 = vmatprep.mubr.bf16.mxu0 0
      %601 = vmatmul.mubr.bf16.gmra.mrb[0].mxu0 %v468
      %v602 = vpop.f32.mrb[0].mxu0
      %v603 = vadd.f32 0.0, %v602
      %v604 = vpop.f32.mrb[0].mxu0
      %v605 = vpop.f32.mrb[0].mxu0
      %v606 = vadd.f32 0.0, %v605
      %v607 = vpop.f32.mrb[0].mxu0
      %608 = vmatprep.mubr.bf16.mxu0 0
      %609 = vmatmul.mubr.bf16.gmra.mrb[0].mxu0 %v469
      %v610 = vpop.f32.mrb[0].mxu0
      %v611 = vadd.f32 0.0, %v610
      %v612 = vpop.f32.mrb[0].mxu0
      %v613 = vpop.f32.mrb[0].mxu0
      %v614 = vadd.f32 0.0, %v613
      %v615 = vpop.f32.mrb[0].mxu0
      %616 = vmatprep.mubr.bf16.mxu0 0
      %617 = vmatmul.mubr.bf16.gmra.mrb[0].mxu0 %v470
      %v618 = vpop.f32.mrb[0].mxu0
      %v619 = vadd.f32 0.0, %v618
      %v620 = vpop.f32.mrb[0].mxu0
      %v621 = vpop.f32.mrb[0].mxu0
      %v622 = vadd.f32 0.0, %v621
      %v623 = vpop.f32.mrb[0].mxu0
      %624 = vmatprep.mubr.bf16.mxu0 0
      %625 = vmatmul.mubr.bf16.gmra.mrb[0].mxu0 %v471
      %v626 = vpop.f32.mrb[0].mxu0
      %v627 = vadd.f32 0.0, %v626
      %v628 = vpop.f32.mrb[0].mxu0
      %v629 = vpop.f32.mrb[0].mxu0
      %v630 = vadd.f32 0.0, %v629
      %v631 = vpop.f32.mrb[0].mxu0
      %632 = vdwg.mxu0
      %633 = vst [vmem:[#allocation12] sm:$0xff] %v571
      %634 = vst [vmem:[#allocation12 + $0x8] sm:$0xff] %v574
      %635 = vst [vmem:[#allocation12 + $0x10] sm:$0xff] %v579
      %636 = vst [vmem:[#allocation12 + $0x18] sm:$0xff] %v582
      %637 = vst [vmem:[#allocation12 + $0x20] sm:$0xff] %v587
      %638 = vst [vmem:[#allocation12 + $0x28] sm:$0xff] %v590
      %639 = vst [vmem:[#allocation12 + $0x30] sm:$0xff] %v595
      %640 = vst [vmem:[#allocation12 + $0x38] sm:$0xff] %v598
      %641 = vst [vmem:[#allocation12 + $0x40] sm:$0xff] %v603
      %642 = vst [vmem:[#allocation12 + $0x48] sm:$0xff] %v606
      %643 = vst [vmem:[#allocation12 + $0x50] sm:$0xff] %v611
      %644 = vst [vmem:[#allocation12 + $0x58] sm:$0xff] %v614
      %645 = vst [vmem:[#allocation12 + $0x60] sm:$0xff] %v619
      %646 = vst [vmem:[#allocation12 + $0x68] sm:$0xff] %v622
      %647 = vst [vmem:[#allocation12 + $0x70] sm:$0xff] %v627
      %648 = vst [vmem:[#allocation12 + $0x78] sm:$0xff] %v630
    $region45: #{tpu_custom_call.1} parent=1 // pred_fallthru
      _
    // Predicated region
    $region46: #{tpu_custom_call.1} parent=1 // pred_check
      _
    $region47: #{tpu_custom_call.1} parent=1 // pred_check_branch
      %650 = sbr.rel (0) target = $region49
    $region48: #{tpu_custom_call.1} parent=1 // pred_region
      %s652 = ssub.s32 2048, 2048
      %653 = vsyncadd [#allocation6], %s652
      %s654 = sshll.u32 [#allocation12], 4
      %s655 = int_to_ptr.vmem [resolvable:$true] %s654
      %660 = dma.vmem_to_hbm [thread:$0]  %s655, 2048, %s5, [#allocation6], 128, 128, 8
    $region49: #{tpu_custom_call.1} parent=1 // pred_fallthru
      _
    // Predicated region
    $region50: #{tpu_custom_call.1} parent=1 // pred_check
      _
    $region51: #{tpu_custom_call.1} parent=1 // pred_check_branch
      %662 = sbr.rel (0) target = $region53
    $region52: #{tpu_custom_call.1} parent=1 // pred_region
      %s664 = ssub.s32 2048, 2048
      %665 = vsyncadd [#allocation14], %s664
      %s666 = sshll.u32 [#allocation13], 4
      %s667 = int_to_ptr.vmem [resolvable:$true] %s666
      %672 = dma.vmem_to_hbm [thread:$0]  %s667, 2048, %s6, [#allocation14], 128, 128, 8
    $region53: #{tpu_custom_call.1} parent=1 // pred_fallthru
      _
    // Predicated region
    $region54: #{tpu_custom_call.1} parent=1 // pred_check
      _
    $region55: #{tpu_custom_call.1} parent=1 // pred_check_branch
      %674 = sbr.rel (0) target = $region57
    $region56: #{tpu_custom_call.1} parent=1 // pred_region
      %675 = dma.done [#allocation6], 2048
    $region57: #{tpu_custom_call.1} parent=1 // pred_fallthru
      _
    // Predicated region
    $region58: #{tpu_custom_call.1} parent=1 // pred_check
      _
    $region59: #{tpu_custom_call.1} parent=1 // pred_check_branch
      %677 = sbr.rel (0) target = $region61
    $region60: #{tpu_custom_call.1} parent=1 // pred_region
      %678 = dma.done [#allocation14], 2048
    $region61: #{tpu_custom_call.1} parent=1 // pred_fallthru
      _
    %679 = vsyncpa [#allocation5], 1
    %680 = vsyncpa [#allocation8], 1
    %681 = vsyncpa [#allocation11], 1
    %682 = vsyncpa [#allocation6], 1
    %683 = vsyncpa [#allocation14], 1

</llo_original>
